<compile_context>
chip_gen: v7x
topology: tpu7x:2x2x1
jax: 0.10.0
libtpu: 0.0.40
codegen_flags: <defaults>
</compile_context>

<pallas_src>
import jax
import jax.numpy as jnp
from jax.experimental import pallas as pl
from jax.experimental.pallas import tpu as pltpu


def _logistic_kernel(xt_ref, w_ref, b_ref, o_ref):
    # xt_ref: (F, TB) VMEM   -- batch on lanes, features on sublanes
    # w_ref : (F, 1)  VMEM   -- one weight per sublane (resident across steps)
    # b_ref : (1, 1)  SMEM   -- scalar bias
    # o_ref : (1, TB) VMEM   -- lane-dense output row
    x = xt_ref[...]
    w = w_ref[...]
    # 8-term feature reduction on VPU/XLU (no MXU push/pop, no w transpose).
    z = jnp.sum(x * w, axis=0, keepdims=True) + b_ref[0, 0]     # (1, TB)
    # Sigmoid lowers to EUP exp + reciprocal (otherwise-idle slot).
    o_ref[...] = jax.nn.sigmoid(z).astype(o_ref.dtype)


def binary_classifier_forward(x, weight, bias, *, tile_b=512):
    """Pallas equivalent of sigmoid(nn.Linear(8, 1)(x)).

    x:      (B, 8) float32
    weight: (1, 8) float32   (nn.Linear storage convention)
    bias:   (1,)   float32
    returns (B, 1) float32
    """
    B, F = x.shape
    # Batch tile: a multiple of 128 lanes; for small B use the whole padded batch.
    TB = min(tile_b, pl.cdiv(B, 128) * 128)
    B_pad = pl.cdiv(B, TB) * TB

    # Lane-dense re-layout in the wrapper (cheap XLA ops): batch -> lanes.
    xt = jnp.pad(x, ((0, B_pad - B), (0, 0))).T        # (F, B_pad)
    wt = weight.T                                      # (F, 1)
    b_smem = bias.reshape(1, 1)                        # scalar in SMEM

    out = pl.pallas_call(
        _logistic_kernel,
        out_shape=jax.ShapeDtypeStruct((1, B_pad), x.dtype),
        grid_spec=pl.GridSpec(
            grid=(B_pad // TB,),
            in_specs=[
                pl.BlockSpec((F, TB), lambda i: (0, i)),   # batch-tiled x.T
                pl.BlockSpec((F, 1), lambda i: (0, 0)),    # weight, resident
                pl.BlockSpec(memory_space=pltpu.SMEM),     # scalar bias
            ],
            out_specs=pl.BlockSpec((1, TB), lambda i: (0, i)),
        ),
        compiler_params=pltpu.CompilerParams(
            dimension_semantics=("parallel",),             # shard batch across TCs (v7x)
        ),
    )(xt, wt, b_smem)

    return out[0, :B].reshape(B, 1)


if __name__ == "__main__":
    key = jax.random.PRNGKey(0)
    kx, kw, kb = jax.random.split(key, 3)

    F = 8
    # Deterministic nn.Linear(8, 1)-shaped parameters.
    weight = jax.random.normal(kw, (1, F), dtype=jnp.float32) * 0.1
    bias = jax.random.normal(kb, (1,), dtype=jnp.float32) * 0.1

    # Case 1: batch not a multiple of the tile -> exercises padding + 3-step grid.
    B1 = 300
    x1 = jax.random.normal(kx, (B1, F), dtype=jnp.float32)
    out1 = jax.block_until_ready(binary_classifier_forward(x1, weight, bias, tile_b=128))
    ref1 = jax.nn.sigmoid(x1 @ weight.T + bias)
    assert out1.shape == (B1, 1)
    assert jnp.allclose(out1, ref1, atol=1e-5, rtol=1e-5)

    # Case 2: tiny batch (typical for this module) through the same padded path.
    B2 = 8
    x2 = jax.random.normal(kx, (B2, F), dtype=jnp.float32)
    out2 = jax.block_until_ready(binary_classifier_forward(x2, weight, bias))
    ref2 = jax.nn.sigmoid(x2 @ weight.T + bias)
    assert out2.shape == (B2, 1)
    assert jnp.allclose(out2, ref2, atol=1e-5, rtol=1e-5)

    print("KERNEL_OK")
</pallas_src>

<mosaic_0001>
module attributes {stable_mosaic.version = 11 : i64} {
  func.func @_logistic_kernel(%arg0: i32, %arg1: memref<8x128xf32, #tpu.memory_space<vmem>>, %arg2: memref<8x1xf32, #tpu.memory_space<vmem>>, %arg3: memref<1x1xf32, #tpu.memory_space<smem>>, %arg4: memref<1x128xf32, #tpu.memory_space<vmem>>) attributes {dimension_semantics = [#tpu.dimension_semantics<parallel>], iteration_bounds = array<i64: 3>, scalar_prefetch = 0 : i64, scratch_operands = 0 : i64, tpu.core_type = #tpu.core_type<tc>, window_params = [{transform_indices = @transform_0, window_bounds = array<i64: 8, 128>}, {pipeline_mode = #tpu.pipeline_mode<synchronous>, transform_indices = @transform_1, window_bounds = array<i64: 8, 1>}, {transform_indices = @transform_2, window_bounds = array<i64: 1, 1>}, {transform_indices = @transform_3, window_bounds = array<i64: 1, 128>}]} {
    %c0 = arith.constant 0 : index
    %c0_0 = arith.constant 0 : index
    %0 = vector.load %arg1[%c0, %c0_0] : memref<8x128xf32, #tpu.memory_space<vmem>>, vector<8x128xf32>
    %c0_1 = arith.constant 0 : index
    %c0_2 = arith.constant 0 : index
    %1 = vector.load %arg2[%c0_1, %c0_2] : memref<8x1xf32, #tpu.memory_space<vmem>>, vector<8x1xf32>
    %2 = vector.broadcast %1 : vector<8x1xf32> to vector<8x128xf32>
    %3 = arith.mulf %0, %2 : vector<8x128xf32>
    %cst = arith.constant dense<0.000000e+00> : vector<128xf32>
    %4 = vector.multi_reduction <add>, %3, %cst [0] : vector<8x128xf32> to vector<128xf32>
    %5 = vector.shape_cast %4 : vector<128xf32> to vector<1x128xf32>
    %c0_3 = arith.constant 0 : index
    %c0_4 = arith.constant 0 : index
    %6 = memref.load %arg3[%c0_3, %c0_4] : memref<1x1xf32, #tpu.memory_space<smem>>
    %7 = vector.broadcast %6 : f32 to vector<1x128xf32>
    %8 = arith.addf %5, %7 : vector<1x128xf32>
    %9 = arith.negf %8 : vector<1x128xf32>
    %10 = math.exp %9 : vector<1x128xf32>
    %cst_5 = arith.constant 1.000000e+00 : f32
    %11 = vector.broadcast %cst_5 : f32 to vector<1x128xf32>
    %12 = arith.addf %11, %10 : vector<1x128xf32>
    %13 = arith.divf %11, %12 : vector<1x128xf32>
    %c0_6 = arith.constant 0 : index
    %c0_7 = arith.constant 0 : index
    %14 = vector.load %arg4[%c0_6, %c0_7] : memref<1x128xf32, #tpu.memory_space<vmem>>, vector<1x128xf32>
    tpu.vector_store %arg4[%c0_6, %c0_7], %13 {strides = array<i32>} : memref<1x128xf32, #tpu.memory_space<vmem>>, vector<1x128xf32>,
    return
  }
  func.func @transform_0(%arg0: i32) -> (i32, i32) {
    %c0_i32 = arith.constant 0 : i32
    %c0_i32_0 = arith.constant 0 : i32
    return %c0_i32, %arg0 : i32, i32
  }
  func.func @transform_1(%arg0: i32) -> (i32, i32) {
    %c0_i32 = arith.constant 0 : i32
    %c0_i32_0 = arith.constant 0 : i32
    %c0_i32_1 = arith.constant 0 : i32
    return %c0_i32, %c0_i32_0 : i32, i32
  }
  func.func @transform_2(%arg0: i32) -> (i32, i32) {
    %c0_i32 = arith.constant 0 : i32
    %c0_i32_0 = arith.constant 0 : i32
    %c0_i32_1 = arith.constant 0 : i32
    return %c0_i32, %c0_i32_0 : i32, i32
  }
  func.func @transform_3(%arg0: i32) -> (i32, i32) {
    %c0_i32 = arith.constant 0 : i32
    %c0_i32_0 = arith.constant 0 : i32
    return %c0_i32, %arg0 : i32, i32
  }
}

</mosaic_0001>

<llo_original>
// kernel: tpu_custom_call.1
$region0: #{tpu_custom_call.1}
  #allocation0 [shape = 'u32[]', space=smem, size = 0x4, offset = 0x4, fixed_abs, tag = 'smem constant byte address 0x4 - core index']
  #allocation1 [shape = 'u32[144,128]{1,0:T(1,128)}', space=vmem, size = 0x12000, scoped, tag = 'internal scratch']
  #allocation2 [shape = 'f32[1,1]{1,0:T(1,128)S(6)}', space=smem, size = 0x200, scoped, tag = 'scoped memory for tpu_custom_call.1']
  %s0 = inlined_call_operand.hbm [shape: f32[8,384], index: 0, kind: input, shape index: {}]
  %s1 = inlined_call_operand.vmem [shape: f32[8,1], index: 1, kind: input, shape index: {}]
  %s2 = inlined_call_operand.<no memory space> [shape: f32[1,1], index: 2, kind: input, shape index: {}]
  %s3 = inlined_call_operand.hbm [shape: f32[1,384], index: 3, kind: output, shape index: {}]
  %s4 = sld [smem:[#allocation0]]
  $region49: #{tpu_custom_call.1} parent=0
    _
  %s6 = ssub.s32 1, %s4
  %s7 = scalar_select 0, %s6, %s4
  %8 = sst [smem:[#allocation2]] %s2
  $region1: #{tpu_custom_call.1} parent=0
    #allocation3 [shape = 'u8[8192]{0}', space=vmem, size = 0x2000, scoped, tag = 'input window, operand 0']
    #allocation4 [shape = 's32[2]{0}', space=sflag, size = 0x8, scoped, tag = 'scoped memory for tpu_custom_call.1']
    #allocation5 [shape = 's32[2]{0}', space=sflag, size = 0x8, scoped, tag = 'scoped memory for tpu_custom_call.1']
    #allocation6 [shape = 'u8[1024]{0}', space=vmem, size = 0x400, scoped, tag = 'output window, operand 0']
    %9 = vsyncpa [#allocation4], 0
    %s10 = scalar_lea.sflag [#allocation4], 1
    %11 = vsyncpa %s10, 0
    %12 = vsyncpa [#allocation5], 0
    %s13 = scalar_lea.sflag [#allocation5], 1
    %14 = vsyncpa %s13, 0
    loop: start=0, step=1, limit=5
    $region2: #{tpu_custom_call.1} parent=1 // loop_pre_header
      _
    $region3: #{tpu_custom_call.1} parent=1 // loop_header
      %s16 = sphi 0, %s20
      %p17 = scmp.ge.s32.totalorder %s16, 5
      %s26 = sphi 0, %s28
      %s29 = sphi 0, %s26
      %s30 = sphi 0, %s29
      %s46 = sphi 0, %s30
      %s50 = sphi 0, %s50
      %s52 = sphi 0, %s50
      %s53 = sphi 0, %s52
      %s67 = sphi 0, %s53
      %s71 = sphi 0, %s71
      %s73 = sphi 0, %s71
      %s74 = sphi 0, %s73
      %s88 = sphi 0, %s74
      %s94 = sphi 0, %s96
      %s97 = sphi 0, %s94
      %s98 = sphi 0, %s97
      %s114 = sphi 0, %s98
    $region4: #{tpu_custom_call.1} parent=1 // loop_header_branch
      %19 = sbr.rel (%p17) target = $region8
    $region5: #{tpu_custom_call.1} parent=1 // loop_body
      %s21 = ssub.s32 %s16, 1
      %s22 = ssub.s32 %s16, 2
      %s23 = sadd.s32 %s16, 1
      %s24 = ssub.s32 %s16, %s23
      %p25 = scmp.eq.s32.totalorder %s24, 0
      %s27 = sadd.s32 %s26, 1
      %s28 = scalar_select %p25, %s26, %s27
      %p31 = pneg %p25
      %p32 = scmp.eq.s32.totalorder %s16, 2
      %p33 = por %p31, %p32
      %p34 = scmp.ne.s32.totalorder %s26, %s29
      %p35 = scmp.eq.s32.totalorder %s16, 0
      %p36 = por %p34, %p35
      %p37 = scmp.ne.s32.totalorder %s26, %s29
      %p38 = scmp.eq.s32.totalorder %s21, 2
      %p39 = por %p37, %p38
      %p40 = scmp.ne.s32.totalorder %s29, %s30
      %p41 = scmp.eq.s32.totalorder %s21, 0
      %p42 = por %p40, %p41
      %p43 = scmp.ne.s32.totalorder %s29, %s30
      %p44 = scmp.eq.s32.totalorder %s22, 2
      %p45 = por %p43, %p44
      %p47 = scmp.ne.s32.totalorder %s30, %s46
      %p48 = scmp.eq.s32.totalorder %s22, 0
      %p49 = por %p47, %p48
      %s51 = sadd.s32 %s50, 1
      %p54 = scmp.eq.s32.totalorder %s16, 2
      %p55 = scmp.ne.s32.totalorder %s50, %s52
      %p56 = scmp.eq.s32.totalorder %s16, 0
      %p57 = por %p55, %p56
      %p58 = scmp.ne.s32.totalorder %s50, %s52
      %p59 = scmp.eq.s32.totalorder %s21, 2
      %p60 = por %p58, %p59
      %p61 = scmp.ne.s32.totalorder %s52, %s53
      %p62 = scmp.eq.s32.totalorder %s21, 0
      %p63 = por %p61, %p62
      %p64 = scmp.ne.s32.totalorder %s52, %s53
      %p65 = scmp.eq.s32.totalorder %s22, 2
      %p66 = por %p64, %p65
      %p68 = scmp.ne.s32.totalorder %s53, %s67
      %p69 = scmp.eq.s32.totalorder %s22, 0
      %p70 = por %p68, %p69
      %s72 = sadd.s32 %s71, 1
      %p75 = scmp.eq.s32.totalorder %s16, 2
      %p76 = scmp.ne.s32.totalorder %s71, %s73
      %p77 = scmp.eq.s32.totalorder %s16, 0
      %p78 = por %p76, %p77
      %p79 = scmp.ne.s32.totalorder %s71, %s73
      %p80 = scmp.eq.s32.totalorder %s21, 2
      %p81 = por %p79, %p80
      %p82 = scmp.ne.s32.totalorder %s73, %s74
      %p83 = scmp.eq.s32.totalorder %s21, 0
      %p84 = por %p82, %p83
      %p85 = scmp.ne.s32.totalorder %s73, %s74
      %p86 = scmp.eq.s32.totalorder %s22, 2
      %p87 = por %p85, %p86
      %p89 = scmp.ne.s32.totalorder %s74, %s88
      %p90 = scmp.eq.s32.totalorder %s22, 0
      %p91 = por %p89, %p90
      %s92 = ssub.s32 %s16, %s23
      %p93 = scmp.eq.s32.totalorder %s92, 0
      %s95 = sadd.s32 %s94, 1
      %s96 = scalar_select %p93, %s94, %s95
      %p99 = pneg %p93
      %p100 = scmp.eq.s32.totalorder %s16, 2
      %p101 = por %p99, %p100
      %p102 = scmp.ne.s32.totalorder %s94, %s97
      %p103 = scmp.eq.s32.totalorder %s16, 0
      %p104 = por %p102, %p103
      %p105 = scmp.ne.s32.totalorder %s94, %s97
      %p106 = scmp.eq.s32.totalorder %s21, 2
      %p107 = por %p105, %p106
      %p108 = scmp.ne.s32.totalorder %s97, %s98
      %p109 = scmp.eq.s32.totalorder %s21, 0
      %p110 = por %p108, %p109
      %p111 = scmp.ne.s32.totalorder %s97, %s98
      %p112 = scmp.eq.s32.totalorder %s22, 2
      %p113 = por %p111, %p112
      %p115 = scmp.ne.s32.totalorder %s98, %s114
      %p116 = scmp.eq.s32.totalorder %s22, 0
      %p117 = por %p115, %p116
      %p118 = scmp.le.s32.totalorder 1, %s16
      %p119 = scmp.lt.s32.totalorder %s16, 4
      %p120 = pnand %p118, %p119
      %p121 = pneg %p120
      // Predicated region
      $region9: #{tpu_custom_call.1} parent=5 // pred_check
        _
      $region10: #{tpu_custom_call.1} parent=5 // pred_check_branch
        %123 = sbr.rel (%p120) target = $region12
      $region11: #{tpu_custom_call.1} parent=5 // pred_region
        %s124 = ssub.s32 %s16, 1
        // Predicated region
        $region13: #{tpu_custom_call.1} parent=11 // pred_check
          %p125 = pneg %p63
        $region14: #{tpu_custom_call.1} parent=11 // pred_check_branch
          %127 = sbr.rel (%p125) target = $region16
        $region15: #{tpu_custom_call.1} parent=11 // pred_region
          _
        $region16: #{tpu_custom_call.1} parent=11 // pred_fallthru
          _
        // Predicated region
        $region17: #{tpu_custom_call.1} parent=11 // pred_check
          %p128 = pneg %p84
        $region18: #{tpu_custom_call.1} parent=11 // pred_check_branch
          %130 = sbr.rel (%p128) target = $region20
        $region19: #{tpu_custom_call.1} parent=11 // pred_region
          _
        $region20: #{tpu_custom_call.1} parent=11 // pred_fallthru
          _
      $region12: #{tpu_custom_call.1} parent=5 // pred_fallthru
        _
      %p131 = scmp.lt.s32.totalorder %s16, 3
      // Predicated region
      $region21: #{tpu_custom_call.1} parent=5 // pred_check
        %p132 = pneg %p131
      $region22: #{tpu_custom_call.1} parent=5 // pred_check_branch
        %134 = sbr.rel (%p132) target = $region24
      $region23: #{tpu_custom_call.1} parent=5 // pred_region
        // Predicated region
        $region25: #{tpu_custom_call.1} parent=23 // pred_check
          %p135 = pneg %p36
        $region26: #{tpu_custom_call.1} parent=23 // pred_check_branch
          %137 = sbr.rel (%p135) target = $region28
        $region27: #{tpu_custom_call.1} parent=23 // pred_region
          %s138 = sand.u32 %s26, 1
          %s139 = scalar_lea.sflag [#allocation4], %s138
          %s140 = sand.u32 %s26, 1
          %s141 = smul.addr %s140, 8
          %s142 = scalar_lea.vmem [#allocation3], %s141
          %s144 = ssub.s32 128, 128
          %145 = vsyncadd %s139, %s144
          %s146 = smul.addr %s16, 128
          %s147 = scalar_lea.hbm %s0, %s146
          %s149 = sshll.u32 %s142, 4
          %s150 = int_to_ptr.vmem [resolvable:$true] %s149
          %152 = dma.hbm_to_vmem [thread:$0]  %s147, 128, %s150, %s139
        $region28: #{tpu_custom_call.1} parent=23 // pred_fallthru
          _
      $region24: #{tpu_custom_call.1} parent=5 // pred_fallthru
        _
      %p153 = scmp.le.s32.totalorder 1, %s16
      %p154 = scmp.lt.s32.totalorder %s16, 4
      %p155 = pnand %p153, %p154
      %p156 = pneg %p155
      // Predicated region
      $region29: #{tpu_custom_call.1} parent=5 // pred_check
        _
      $region30: #{tpu_custom_call.1} parent=5 // pred_check_branch
        %158 = sbr.rel (%p155) target = $region32
      $region31: #{tpu_custom_call.1} parent=5 // pred_region
        %s159 = ssub.s32 %s16, 1
        %s160 = sand.u32 %s29, 1
        %s161 = scalar_lea.sflag [#allocation4], %s160
        %s162 = sand.u32 %s29, 1
        %s163 = smul.addr %s162, 8
        %s164 = scalar_lea.vmem [#allocation3], %s163
        // Predicated region
        $region33: #{tpu_custom_call.1} parent=31 // pred_check
          %p165 = pneg %p42
        $region34: #{tpu_custom_call.1} parent=31 // pred_check_branch
          %167 = sbr.rel (%p165) target = $region36
        $region35: #{tpu_custom_call.1} parent=31 // pred_region
          %168 = dma.done %s161, 128
        $region36: #{tpu_custom_call.1} parent=31 // pred_fallthru
          _
        %s169 = sand.u32 %s29, 1
        %s170 = scalar_lea.sflag [#allocation4], %s169
        %s171 = sand.u32 %s29, 1
        %s172 = smul.addr %s171, 8
        %s173 = scalar_lea.vmem [#allocation3], %s172
        %p174 = pneg %p42
        %p175 = pneg %p39
        %p176 = pneg %p63
        %p177 = pneg %p60
        %p178 = pneg %p84
        %p179 = pneg %p81
        %p180 = pneg %p110
        %p181 = pneg %p107
        %s182 = sand.u32 %s97, 1
        %s183 = scalar_lea.sflag [#allocation5], %s182
        %s184 = sand.u32 %s97, 1
        %s185 = scalar_lea.vmem [#allocation6], %s184
        %v186 = vld [vmem:[%s164] sm:$0xff]
        %v187 = vld [vmem:[%s1] sm:$0xff]
        %189 = vset.pattern.permute.xlu0 0
        %190 = vperm.xlu0 %189, %v187
        %v191 = vpop.permute.xlu0 %190
        %v193 = vmul.f32 %v186, %v191
        %v194 = vrot.slane %v193, 4
        %v195 = vadd.f32 %v193, %v194
        %v196 = vrot.slane %v195, 2
        %v197 = vadd.f32 %v195, %v196
        %v198 = vrot.slane %v197, 1
        %v199 = vadd.f32 %v197, %v198
        %s200 = sld [smem:[#allocation2]]
        %v201 = vstv %s200
        %v202 = vadd.f32 %v199, %v201
        %v203 = vxor.u32 %v202, 2147483648
        %v204 = vmul.f32 %v203, 1.442695
        %v205 = vpow.pop %v204
        %v206 = vadd.f32 %v205, 1.0
        %v207 = vrcp.pop %v206
        %v208 = vmul.f32 1.0, %v207
        %209 = vst [vmem:[%s185] sm:$0x1] %v208
        %s210 = sand.u32 %s97, 1
        %s211 = scalar_lea.sflag [#allocation5], %s210
        %s212 = sand.u32 %s97, 1
        %s213 = scalar_lea.vmem [#allocation6], %s212
        // Predicated region
        $region37: #{tpu_custom_call.1} parent=31 // pred_check
          %p214 = pneg %p107
        $region38: #{tpu_custom_call.1} parent=31 // pred_check_branch
          %216 = sbr.rel (%p214) target = $region40
        $region39: #{tpu_custom_call.1} parent=31 // pred_region
          %s218 = ssub.s32 16, 16
          %219 = vsyncadd %s211, %s218
          %s220 = smul.addr %s21, 16
          %s221 = scalar_lea.hbm %s3, %s220
          %s223 = sshll.u32 %s213, 4
          %s224 = int_to_ptr.vmem [resolvable:$true] %s223
          %226 = dma.vmem_to_hbm [thread:$0]  %s224, 16, %s221, %s211
        $region40: #{tpu_custom_call.1} parent=31 // pred_fallthru
          _
      $region32: #{tpu_custom_call.1} parent=5 // pred_fallthru
        _
      %p227 = scmp.le.s32.totalorder 2, %s16
      // Predicated region
      $region41: #{tpu_custom_call.1} parent=5 // pred_check
        %p228 = pneg %p227
      $region42: #{tpu_custom_call.1} parent=5 // pred_check_branch
        %230 = sbr.rel (%p228) target = $region44
      $region43: #{tpu_custom_call.1} parent=5 // pred_region
        %s231 = ssub.s32 %s16, 2
        // Predicated region
        $region45: #{tpu_custom_call.1} parent=43 // pred_check
          %p232 = pneg %p113
        $region46: #{tpu_custom_call.1} parent=43 // pred_check_branch
          %234 = sbr.rel (%p232) target = $region48
        $region47: #{tpu_custom_call.1} parent=43 // pred_region
          %s235 = sand.u32 %s98, 1
          %s236 = scalar_lea.sflag [#allocation5], %s235
          %s237 = sand.u32 %s98, 1
          %s238 = scalar_lea.vmem [#allocation6], %s237
          %239 = dma.done %s236, 16
        $region48: #{tpu_custom_call.1} parent=43 // pred_fallthru
          _
      $region44: #{tpu_custom_call.1} parent=5 // pred_fallthru
        _
    $region6: #{tpu_custom_call.1} parent=1 // loop_footer
      %s20 = sadd.s32 1, %s16
    $region7: #{tpu_custom_call.1} parent=1 // loop_footer_branch
      %15 = sbr.rel target = $region3
    $region8: #{tpu_custom_call.1} parent=1 // loop_exit
      _
    %240 = vsyncpa [#allocation4], 1
    %s241 = scalar_lea.sflag [#allocation4], 1
    %242 = vsyncpa %s241, 1
    %243 = vsyncpa [#allocation5], 1
    %s244 = scalar_lea.sflag [#allocation5], 1
    %245 = vsyncpa %s244, 1

</llo_original>
